<compile_context>
chip_gen: v7x
topology: tpu7x:2x2x1
jax: 0.10.0
libtpu: 0.0.40
codegen_flags: <defaults>
</compile_context>

<pallas_src>
import jax
import jax.numpy as jnp
from jax.experimental import pallas as pl
from jax.experimental.pallas import tpu as pltpu


# ---------------------------------------------------------------------------
# Fused single-pass kernel (main path): pool + excitation + scale per batch tile
# ---------------------------------------------------------------------------
def _se_fused_kernel(alpha_ref, x_ref, w1_ref, b1_ref, w2_ref, b2_ref, o_ref):
    # alpha_ref: (1,) f32 SMEM (scalar prefetch)  -- PReLU slope
    # x_ref:     (Bt, C, HW) VMEM, native dtype
    # w1_ref:    (C, Cr) f32   fc1 weight^T with 1/HW folded in
    # b1_ref:    (1, Cr) f32
    # w2_ref:    (Cr, C) f32   fc2 weight^T
    # b2_ref:    (1, C)  f32
    # o_ref:     (Bt, C, HW) native dtype

    # Squeeze: spatial sum, accumulated in f32 (1/HW is folded into w1).
    pooled = jnp.sum(x_ref[...].astype(jnp.float32), axis=-1)          # (Bt, C)

    # Excitation: fc1 -> PReLU -> fc2 -> sigmoid (tiny; hides under block DMA).
    h = jnp.dot(pooled, w1_ref[...],
                preferred_element_type=jnp.float32) + b1_ref[...]      # (Bt, Cr)
    alpha = alpha_ref[0]
    h = jnp.where(h >= 0, h, alpha * h)
    s = jnp.dot(h, w2_ref[...],
                preferred_element_type=jnp.float32) + b2_ref[...]      # (Bt, C)
    s = jax.nn.sigmoid(s)

    # Scale: re-read x so the big block is not held live across the excitation;
    # multiply in f32 (v5e has no bf16 VALU) and cast back on the store.
    o_ref[...] = (x_ref[...].astype(jnp.float32) * s[:, :, None]).astype(o_ref.dtype)


# ---------------------------------------------------------------------------
# Two-pass fallback kernels (only when a single (C, HW) slab exceeds the budget)
# ---------------------------------------------------------------------------
def _pool_sum_kernel(x_ref, p_ref):
    # x_ref: (1, C, hw_tile) native dtype; p_ref: (1, 1, C) f32 accumulator.
    @pl.when(pl.program_id(1) == 0)
    def _():
        p_ref[...] = jnp.zeros_like(p_ref)

    p_ref[...] += jnp.sum(x_ref[...].astype(jnp.float32), axis=-1)[:, None, :]


def _scale_kernel(x_ref, s_ref, o_ref):
    # x_ref/o_ref: (1, C, hw_tile) native dtype; s_ref: (1, C, 1) f32 per-channel scale.
    o_ref[...] = (x_ref[...].astype(jnp.float32) * s_ref[...]).astype(o_ref.dtype)


# ---------------------------------------------------------------------------
# Hardware-aware sizing helpers
# ---------------------------------------------------------------------------
def _tpu_vmem_and_cores():
    """(VMEM capacity bytes, TensorCores per chip) with conservative fallbacks."""
    vmem_cap = 64 << 20                       # conservative default (v7x-sized)
    try:
        vmem_cap = int(pltpu.get_tpu_info().vmem_capacity_bytes)
    except Exception:
        pass
    cores = 1                                 # v5e / v6e: single TensorCore
    try:
        kind = jax.devices()[0].device_kind.lower()
        if ("v7" in kind) or ("v5p" in kind) or ("v4" in kind):
            cores = 2                         # dual-TensorCore generations
    except Exception:
        pass
    return vmem_cap, cores


def _choose_batch_tile(batch, bytes_per_batch, block_budget, num_cores):
    """Largest divisor of `batch` whose block fits `block_budget`; on dual-TC
    chips prefer >= 2 grid steps per core so both cores get work and the
    software pipeline can overlap DMA with compute."""
    divisors = [d for d in range(1, batch + 1) if batch % d == 0]
    fitting = [d for d in divisors if d * bytes_per_batch <= block_budget]
    if not fitting:
        return 1
    bt = max(fitting)
    if num_cores >= 2:
        target_steps = min(batch, 2 * num_cores)
        good = [d for d in fitting if batch // d >= target_steps]
        bt = max(good) if good else 1
    return bt


# ---------------------------------------------------------------------------
# Wrapper
# ---------------------------------------------------------------------------
def se_block(x_nchw, w1, b1, alpha, w2, b2, *,
             block_budget_bytes=None, max_fused_slab_bytes=None):
    """SEBlock forward.  PyTorch nn.Linear conventions:
       w1: (Cr, C), b1: (Cr,), w2: (C, Cr), b2: (C,), alpha: scalar PReLU slope.
       Output dtype == input dtype (I/O is streamed in the native dtype)."""
    B, C, H, W = x_nchw.shape
    HW = H * W
    Cr = w1.shape[0]
    inv_hw = 1.0 / float(HW)

    x_dtype = x_nchw.dtype
    itemsize = jnp.dtype(x_dtype).itemsize
    x_flat = x_nchw.reshape(B, C, HW)                      # free bitcast, no copy

    hp = jax.lax.Precision.HIGHEST
    # fc params in f32 (tiny); fold 1/HW into fc1 so the kernel pools a raw sum.
    w1_t = w1.T.astype(jnp.float32) * inv_hw               # (C, Cr)
    w2_t = w2.T.astype(jnp.float32)                        # (Cr, C)
    b1_2d = b1.reshape(1, Cr).astype(jnp.float32)
    b2_2d = b2.reshape(1, C).astype(jnp.float32)
    alpha_1d = jnp.asarray(alpha, jnp.float32).reshape(1)  # -> SMEM scalar prefetch

    vmem_cap, cores = _tpu_vmem_and_cores()
    block_budget = (block_budget_bytes if block_budget_bytes is not None
                    else vmem_cap // 16)                   # 4 MiB v7x, 8 MiB v5e/v6e
    # Largest single-batch slab we fuse in one pass (sized so double-buffered
    # in+out blocks plus f32 temporaries stay inside the vmem_limit cap).
    single_slab_limit = (max_fused_slab_bytes if max_fused_slab_bytes is not None
                         else vmem_cap // (8 if itemsize >= 4 else 10))

    bytes_per_batch = C * HW * itemsize
    param_bytes = (C * Cr + Cr * C + Cr + C) * 4

    if bytes_per_batch <= single_slab_limit:
        # ----------------- main path: one fused kernel over batch tiles -----
        bt = _choose_batch_tile(B, bytes_per_batch,
                                max(block_budget, bytes_per_batch), cores)
        grid = (B // bt,)
        block_bytes = bt * bytes_per_batch
        block_bytes_f32 = bt * C * HW * 4
        vmem_limit = 4 * block_bytes + block_bytes_f32 + 4 * param_bytes + (2 << 20)
        vmem_limit = int(min(max(vmem_limit, 16 << 20), vmem_cap * 5 // 8))

        out_flat = pl.pallas_call(
            _se_fused_kernel,
            out_shape=jax.ShapeDtypeStruct((B, C, HW), x_dtype),
            grid_spec=pltpu.PrefetchScalarGridSpec(
                num_scalar_prefetch=1,                              # alpha -> SMEM
                grid=grid,
                in_specs=[
                    # TODO(synk): on v7x, pipeline_mode=pl.Buffered(3) here is a
                    # cheap sweep if a trace shows exposed input DMA at step edges.
                    pl.BlockSpec((bt, C, HW), lambda b, _alpha: (b, 0, 0)),   # x
                    pl.BlockSpec((C, Cr), lambda b, _alpha: (0, 0)),          # w1^T/HW
                    pl.BlockSpec((1, Cr), lambda b, _alpha: (0, 0)),          # b1
                    pl.BlockSpec((Cr, C), lambda b, _alpha: (0, 0)),          # w2^T
                    pl.BlockSpec((1, C), lambda b, _alpha: (0, 0)),           # b2
                ],
                out_specs=pl.BlockSpec((bt, C, HW), lambda b, _alpha: (b, 0, 0)),
            ),
            compiler_params=pltpu.CompilerParams(
                dimension_semantics=("parallel",),
                vmem_limit_bytes=vmem_limit,
            ),
        )(alpha_1d, x_flat, w1_t, b1_2d, w2_t, b2_2d)
        return out_flat.reshape(B, C, H, W)

    # ----------------- fallback path: two passes over HW chunks -------------
    # Only reached when one (C, HW) slab exceeds the VMEM budget.  Trades one
    # extra read of x (plus a pad/slice copy) for robustness at very large C*HW.
    lanes_budget = block_budget // max(C * itemsize, 1)
    hw_tile = min(max(128, (lanes_budget // 128) * 128), ((HW + 127) // 128) * 128)
    hwp = ((HW + hw_tile - 1) // hw_tile) * hw_tile
    x_pad = jnp.pad(x_flat, ((0, 0), (0, 0), (0, hwp - HW))) if hwp != HW else x_flat
    n_hw = hwp // hw_tile

    fb_block = C * hw_tile * itemsize
    fb_vmem = int(min(max(4 * fb_block + 2 * C * hw_tile * 4 + (2 << 20), 16 << 20),
                      vmem_cap * 5 // 8))

    # Pass 1: per-channel spatial sums (zero padding does not perturb the sum).
    pooled = pl.pallas_call(
        _pool_sum_kernel,
        out_shape=jax.ShapeDtypeStruct((B, 1, C), jnp.float32),
        grid=(B, n_hw),
        in_specs=[pl.BlockSpec((1, C, hw_tile), lambda b, hh: (b, 0, hh))],
        out_specs=pl.BlockSpec((1, 1, C), lambda b, hh: (b, 0, 0)),
        compiler_params=pltpu.CompilerParams(
            dimension_semantics=("parallel", "arbitrary"),
            vmem_limit_bytes=fb_vmem,
        ),
    )(x_pad)

    # Tiny (B, C) excitation in plain JAX — negligible next to the x traffic.
    y = pooled.reshape(B, C)                                # raw sums; /HW folded in w1_t
    h = jnp.dot(y, w1_t, precision=hp) + b1_2d
    a = jnp.asarray(alpha, jnp.float32)
    h = jnp.where(h >= 0, h, a * h)
    s = jax.nn.sigmoid(jnp.dot(h, w2_t, precision=hp) + b2_2d)
    s3 = s.astype(jnp.float32).reshape(B, C, 1)

    # Pass 2: scale x by the per-channel gate.
    out_pad = pl.pallas_call(
        _scale_kernel,
        out_shape=jax.ShapeDtypeStruct((B, C, hwp), x_dtype),
        grid=(B, n_hw),
        in_specs=[pl.BlockSpec((1, C, hw_tile), lambda b, hh: (b, 0, hh)),
                  pl.BlockSpec((1, C, 1), lambda b, hh: (b, 0, 0))],
        out_specs=pl.BlockSpec((1, C, hw_tile), lambda b, hh: (b, 0, hh)),
        compiler_params=pltpu.CompilerParams(
            dimension_semantics=("parallel", "parallel"),
            vmem_limit_bytes=fb_vmem,
        ),
    )(x_pad, s3)
    return out_pad[:, :, :HW].reshape(B, C, H, W)


# ---------------------------------------------------------------------------
# Pure-JAX reference (exact f32 matmuls)
# ---------------------------------------------------------------------------
def _reference(x, w1, b1, alpha, w2, b2):
    hp = jax.lax.Precision.HIGHEST
    xf = x.astype(jnp.float32)
    y = jnp.mean(xf, axis=(2, 3))                           # (B, C)
    h = jnp.dot(y, w1.T.astype(jnp.float32), precision=hp) + b1.astype(jnp.float32)
    h = jnp.where(h >= 0, h, jnp.asarray(alpha, jnp.float32) * h)
    s = jax.nn.sigmoid(jnp.dot(h, w2.T.astype(jnp.float32), precision=hp)
                       + b2.astype(jnp.float32))
    return xf * s[:, :, None, None]


if __name__ == "__main__":
    # Shapes consistent with the module: B=2, C=64, reduction=16, 16x16 spatial.
    B, C, H, W = 2, 64, 16, 16
    reduction = 16
    Cr = C // reduction

    key = jax.random.PRNGKey(0)
    k_x, k_w1, k_b1, k_w2, k_b2 = jax.random.split(key, 5)

    x = jax.random.normal(k_x, (B, C, H, W), dtype=jnp.float32)
    # Deterministic synthetic parameters (PyTorch nn.Linear layout).
    w1 = jax.random.normal(k_w1, (Cr, C), dtype=jnp.float32) * 0.1
    b1 = jax.random.normal(k_b1, (Cr,), dtype=jnp.float32) * 0.1
    w2 = jax.random.normal(k_w2, (C, Cr), dtype=jnp.float32) * 0.1
    b2 = jax.random.normal(k_b2, (C,), dtype=jnp.float32) * 0.1
    alpha = jnp.float32(0.25)  # PyTorch PReLU default init

    ref = _reference(x, w1, b1, alpha, w2, b2)

    # 1) fused single-pass path, f32 I/O.
    out = se_block(x, w1, b1, alpha, w2, b2)
    jax.block_until_ready(out)
    assert out.shape == (B, C, H, W) and out.dtype == x.dtype
    # Tolerance covers MXU f32 pass-decomposition differences vs XLA reference.
    assert jnp.allclose(out, ref, atol=1e-3, rtol=1e-3), "f32 fused path mismatch"

    # 2) fused path with native bf16 I/O (streams half the HBM bytes).
    x_bf16 = x.astype(jnp.bfloat16)
    out_bf = se_block(x_bf16, w1, b1, alpha, w2, b2)
    jax.block_until_ready(out_bf)
    assert out_bf.dtype == jnp.bfloat16
    ref_bf = _reference(x_bf16, w1, b1, alpha, w2, b2)
    assert jnp.allclose(out_bf.astype(jnp.float32), ref_bf.astype(jnp.float32),
                        atol=5e-2, rtol=5e-2), "bf16 fused path mismatch"

    # 3) forced two-pass fallback (path used when a (C, HW) slab won't fit VMEM).
    out_fb = se_block(x, w1, b1, alpha, w2, b2,
                      block_budget_bytes=C * 128 * 4,   # -> hw_tile=128, 2 chunks
                      max_fused_slab_bytes=1)
    jax.block_until_ready(out_fb)
    assert jnp.allclose(out_fb, ref, atol=1e-3, rtol=1e-3), "fallback path mismatch"

    print("KERNEL_OK")
</pallas_src>

<mosaic_0001>
module attributes {stable_mosaic.version = 11 : i64} {
  func.func @_se_fused_kernel(%arg0: i32, %arg1: memref<1xf32, #tpu.memory_space<smem>>, %arg2: memref<2x64x256xf32, #tpu.memory_space<vmem>>, %arg3: memref<64x4xf32, #tpu.memory_space<vmem>>, %arg4: memref<1x4xf32, #tpu.memory_space<vmem>>, %arg5: memref<4x64xf32, #tpu.memory_space<vmem>>, %arg6: memref<1x64xf32, #tpu.memory_space<vmem>>, %arg7: memref<2x64x256xf32, #tpu.memory_space<vmem>>) attributes {dimension_semantics = [#tpu.dimension_semantics<parallel>], iteration_bounds = array<i64: 1>, scalar_prefetch = 1 : i64, scratch_operands = 0 : i64, tpu.core_type = #tpu.core_type<tc>, window_params = [{transform_indices = @transform_0, window_bounds = array<i64: 2, 64, 256>}, {pipeline_mode = #tpu.pipeline_mode<synchronous>, transform_indices = @transform_1, window_bounds = array<i64: 64, 4>}, {pipeline_mode = #tpu.pipeline_mode<synchronous>, transform_indices = @transform_2, window_bounds = array<i64: 1, 4>}, {pipeline_mode = #tpu.pipeline_mode<synchronous>, transform_indices = @transform_3, window_bounds = array<i64: 4, 64>}, {pipeline_mode = #tpu.pipeline_mode<synchronous>, transform_indices = @transform_4, window_bounds = array<i64: 1, 64>}, {transform_indices = @transform_5, window_bounds = array<i64: 2, 64, 256>}]} {
    %c0 = arith.constant 0 : index
    %c0_0 = arith.constant 0 : index
    %c0_1 = arith.constant 0 : index
    %0 = vector.load %arg2[%c0, %c0_0, %c0_1] : memref<2x64x256xf32, #tpu.memory_space<vmem>>, vector<2x64x256xf32>
    %cst = arith.constant dense<0.000000e+00> : vector<2x64xf32>
    %1 = vector.multi_reduction <add>, %0, %cst [2] : vector<2x64x256xf32> to vector<2x64xf32>
    %c0_2 = arith.constant 0 : index
    %c0_3 = arith.constant 0 : index
    %2 = vector.load %arg3[%c0_2, %c0_3] : memref<64x4xf32, #tpu.memory_space<vmem>>, vector<64x4xf32>
    %cst_4 = arith.constant dense<0.000000e+00> : vector<2x4xf32>
    %3 = tpu.matmul %1, %2, %cst_4 {dimension_numbers = #tpu.dot_dimension_numbers<[1], [0], [0], [1], [0, 0, 1, 1], [], []>} : vector<2x64xf32>, vector<64x4xf32>, vector<2x4xf32> -> vector<2x4xf32>
    %c0_5 = arith.constant 0 : index
    %c0_6 = arith.constant 0 : index
    %4 = vector.load %arg4[%c0_5, %c0_6] : memref<1x4xf32, #tpu.memory_space<vmem>>, vector<1x4xf32>
    %5 = vector.broadcast %4 : vector<1x4xf32> to vector<2x4xf32>
    %6 = arith.addf %3, %5 : vector<2x4xf32>
    %c0_7 = arith.constant 0 : index
    %7 = memref.load %arg1[%c0_7] : memref<1xf32, #tpu.memory_space<smem>>
    %cst_8 = arith.constant 0.000000e+00 : f32
    %8 = vector.broadcast %cst_8 : f32 to vector<2x4xf32>
    %9 = arith.cmpf oge, %6, %8 : vector<2x4xf32>
    %10 = vector.broadcast %7 : f32 to vector<2x4xf32>
    %11 = arith.mulf %10, %6 : vector<2x4xf32>
    %12 = arith.select %9, %6, %11 : vector<2x4xi1>, vector<2x4xf32>
    %c0_9 = arith.constant 0 : index
    %c0_10 = arith.constant 0 : index
    %13 = vector.load %arg5[%c0_9, %c0_10] : memref<4x64xf32, #tpu.memory_space<vmem>>, vector<4x64xf32>
    %cst_11 = arith.constant dense<0.000000e+00> : vector<2x64xf32>
    %14 = tpu.matmul %12, %13, %cst_11 {dimension_numbers = #tpu.dot_dimension_numbers<[1], [0], [0], [1], [0, 0, 1, 1], [], []>} : vector<2x4xf32>, vector<4x64xf32>, vector<2x64xf32> -> vector<2x64xf32>
    %c0_12 = arith.constant 0 : index
    %c0_13 = arith.constant 0 : index
    %15 = vector.load %arg6[%c0_12, %c0_13] : memref<1x64xf32, #tpu.memory_space<vmem>>, vector<1x64xf32>
    %16 = vector.broadcast %15 : vector<1x64xf32> to vector<2x64xf32>
    %17 = arith.addf %14, %16 : vector<2x64xf32>
    %18 = arith.negf %17 : vector<2x64xf32>
    %19 = math.exp %18 : vector<2x64xf32>
    %cst_14 = arith.constant 1.000000e+00 : f32
    %20 = vector.broadcast %cst_14 : f32 to vector<2x64xf32>
    %21 = arith.addf %20, %19 : vector<2x64xf32>
    %22 = arith.divf %20, %21 : vector<2x64xf32>
    %c0_15 = arith.constant 0 : index
    %c0_16 = arith.constant 0 : index
    %c0_17 = arith.constant 0 : index
    %23 = vector.load %arg2[%c0_15, %c0_16, %c0_17] : memref<2x64x256xf32, #tpu.memory_space<vmem>>, vector<2x64x256xf32>
    %24 = vector.shape_cast %22 : vector<2x64xf32> to vector<2x64x1xf32>
    %25 = vector.broadcast %24 : vector<2x64x1xf32> to vector<2x64x256xf32>
    %26 = arith.mulf %23, %25 : vector<2x64x256xf32>
    %c0_18 = arith.constant 0 : index
    %c0_19 = arith.constant 0 : index
    %c0_20 = arith.constant 0 : index
    %27 = vector.load %arg7[%c0_18, %c0_19, %c0_20] : memref<2x64x256xf32, #tpu.memory_space<vmem>>, vector<2x64x256xf32>
    tpu.vector_store %arg7[%c0_18, %c0_19, %c0_20], %26 {strides = array<i32>} : memref<2x64x256xf32, #tpu.memory_space<vmem>>, vector<2x64x256xf32>,
    return
  }
  func.func @transform_0(%arg0: i32, %arg1: memref<1xf32, #tpu.memory_space<smem>>) -> (i32, i32, i32) {
    %c0_i32 = arith.constant 0 : i32
    %c0_i32_0 = arith.constant 0 : i32
    %c0_i32_1 = arith.constant 0 : i32
    return %arg0, %c0_i32, %c0_i32_0 : i32, i32, i32
  }
  func.func @transform_1(%arg0: i32, %arg1: memref<1xf32, #tpu.memory_space<smem>>) -> (i32, i32) {
    %c0_i32 = arith.constant 0 : i32
    %c0_i32_0 = arith.constant 0 : i32
    %c0_i32_1 = arith.constant 0 : i32
    return %c0_i32, %c0_i32_0 : i32, i32
  }
  func.func @transform_2(%arg0: i32, %arg1: memref<1xf32, #tpu.memory_space<smem>>) -> (i32, i32) {
    %c0_i32 = arith.constant 0 : i32
    %c0_i32_0 = arith.constant 0 : i32
    %c0_i32_1 = arith.constant 0 : i32
    return %c0_i32, %c0_i32_0 : i32, i32
  }
  func.func @transform_3(%arg0: i32, %arg1: memref<1xf32, #tpu.memory_space<smem>>) -> (i32, i32) {
    %c0_i32 = arith.constant 0 : i32
    %c0_i32_0 = arith.constant 0 : i32
    %c0_i32_1 = arith.constant 0 : i32
    return %c0_i32, %c0_i32_0 : i32, i32
  }
  func.func @transform_4(%arg0: i32, %arg1: memref<1xf32, #tpu.memory_space<smem>>) -> (i32, i32) {
    %c0_i32 = arith.constant 0 : i32
    %c0_i32_0 = arith.constant 0 : i32
    %c0_i32_1 = arith.constant 0 : i32
    return %c0_i32, %c0_i32_0 : i32, i32
  }
  func.func @transform_5(%arg0: i32, %arg1: memref<1xf32, #tpu.memory_space<smem>>) -> (i32, i32, i32) {
    %c0_i32 = arith.constant 0 : i32
    %c0_i32_0 = arith.constant 0 : i32
    %c0_i32_1 = arith.constant 0 : i32
    return %arg0, %c0_i32, %c0_i32_0 : i32, i32, i32
  }
}

</mosaic_0001>

<llo_original>
// kernel: tpu_custom_call.1
$region0: #{tpu_custom_call.1}
  #allocation0 [shape = 'u32[]', space=smem, size = 0x4, offset = 0x4, fixed_abs, tag = 'smem constant byte address 0x4 - core index']
  #allocation1 [shape = 'u32[144,128]{1,0:T(1,128)}', space=vmem, size = 0x12000, scoped, tag = 'internal scratch']
  #allocation2 [shape = 's32[1]{0}', space=sflag, size = 0x4, scoped, tag = 'scoped memory for tpu_custom_call.1']
  #allocation3 [shape = 'f32[1]{0:T(128)S(6)}', space=smem, size = 0x200, scoped, tag = 'prefetched SMEM operand 0']
  %s0 = inlined_call_operand.<no memory space> [shape: f32[1], index: 0, kind: input, shape index: {}]
  %s1 = inlined_call_operand.hbm [shape: f32[2,64,256], index: 1, kind: input, shape index: {}]
  %s2 = inlined_call_operand.vmem [shape: f32[64,4], index: 2, kind: input, shape index: {}]
  %s3 = inlined_call_operand.vmem [shape: f32[1,4], index: 3, kind: input, shape index: {}]
  %s4 = inlined_call_operand.vmem [shape: f32[4,64], index: 4, kind: input, shape index: {}]
  %s5 = inlined_call_operand.vmem [shape: f32[1,64], index: 5, kind: input, shape index: {}]
  %s6 = inlined_call_operand.hbm [shape: f32[2,64,256], index: 6, kind: output, shape index: {}]
  %s7 = sld [smem:[#allocation0]]
  $region34: #{tpu_custom_call.1} parent=0
    _
  %s9 = ssub.s32 1, %s7
  %s10 = scalar_select 0, %s9, %s7
  %11 = sst [smem:[#allocation3]] %s0
  $region1: #{tpu_custom_call.1} parent=0
    #allocation4 [shape = 'u8[131072]{0}', space=vmem, size = 0x20000, scoped, tag = 'input window, operand 1, single buffered']
    #allocation5 [shape = 's32[1]{0}', space=sflag, size = 0x4, scoped, tag = 'scoped memory for tpu_custom_call.1']
    #allocation6 [shape = 's32[1]{0}', space=sflag, size = 0x4, scoped, tag = 'scoped memory for tpu_custom_call.1']
    #allocation7 [shape = 'u8[131072]{0}', space=vmem, size = 0x20000, scoped, tag = 'output window, operand 0, single buffered']
    %12 = vsyncpa [#allocation5], 0
    %13 = vsyncpa [#allocation6], 0
    // Predicated region
    $region2: #{tpu_custom_call.1} parent=1 // pred_check
      _
    $region3: #{tpu_custom_call.1} parent=1 // pred_check_branch
      %15 = sbr.rel (0) target = $region5
    $region4: #{tpu_custom_call.1} parent=1 // pred_region
      %s17 = ssub.s32 4096, 4096
      %18 = vsyncadd [#allocation5], %s17
      %s19 = sshll.u32 [#allocation4], 4
      %s20 = int_to_ptr.vmem [resolvable:$true] %s19
      %25 = dma.hbm_to_vmem [thread:$0]  %s1, 4096, %s20, [#allocation5], 256, 256, 16
    $region5: #{tpu_custom_call.1} parent=1 // pred_fallthru
      _
    // Predicated region
    $region6: #{tpu_custom_call.1} parent=1 // pred_check
      _
    $region7: #{tpu_custom_call.1} parent=1 // pred_check_branch
      %27 = sbr.rel (0) target = $region9
    $region8: #{tpu_custom_call.1} parent=1 // pred_region
      _
    $region9: #{tpu_custom_call.1} parent=1 // pred_fallthru
      _
    // Predicated region
    $region10: #{tpu_custom_call.1} parent=1 // pred_check
      _
    $region11: #{tpu_custom_call.1} parent=1 // pred_check_branch
      %29 = sbr.rel (0) target = $region13
    $region12: #{tpu_custom_call.1} parent=1 // pred_region
      _
    $region13: #{tpu_custom_call.1} parent=1 // pred_fallthru
      _
    // Predicated region
    $region14: #{tpu_custom_call.1} parent=1 // pred_check
      _
    $region15: #{tpu_custom_call.1} parent=1 // pred_check_branch
      %31 = sbr.rel (0) target = $region17
    $region16: #{tpu_custom_call.1} parent=1 // pred_region
      _
    $region17: #{tpu_custom_call.1} parent=1 // pred_fallthru
      _
    // Predicated region
    $region18: #{tpu_custom_call.1} parent=1 // pred_check
      _
    $region19: #{tpu_custom_call.1} parent=1 // pred_check_branch
      %33 = sbr.rel (0) target = $region21
    $region20: #{tpu_custom_call.1} parent=1 // pred_region
      _
    $region21: #{tpu_custom_call.1} parent=1 // pred_fallthru
      _
    // Predicated region
    $region22: #{tpu_custom_call.1} parent=1 // pred_check
      _
    $region23: #{tpu_custom_call.1} parent=1 // pred_check_branch
      %35 = sbr.rel (0) target = $region25
    $region24: #{tpu_custom_call.1} parent=1 // pred_region
      %36 = dma.done [#allocation5], 4096
    $region25: #{tpu_custom_call.1} parent=1 // pred_fallthru
      _
    %v37 = vld [vmem:[#allocation4] sm:$0xff]
    %v38 = vld [vmem:[#allocation4 + $0x8] sm:$0xff]
    %v39 = vld [vmem:[#allocation4 + $0x10] sm:$0xff]
    %v40 = vld [vmem:[#allocation4 + $0x18] sm:$0xff]
    %v41 = vld [vmem:[#allocation4 + $0x20] sm:$0xff]
    %v42 = vld [vmem:[#allocation4 + $0x28] sm:$0xff]
    %v43 = vld [vmem:[#allocation4 + $0x30] sm:$0xff]
    %v44 = vld [vmem:[#allocation4 + $0x38] sm:$0xff]
    %v45 = vld [vmem:[#allocation4 + $0x40] sm:$0xff]
    %v46 = vld [vmem:[#allocation4 + $0x48] sm:$0xff]
    %v47 = vld [vmem:[#allocation4 + $0x50] sm:$0xff]
    %v48 = vld [vmem:[#allocation4 + $0x58] sm:$0xff]
    %v49 = vld [vmem:[#allocation4 + $0x60] sm:$0xff]
    %v50 = vld [vmem:[#allocation4 + $0x68] sm:$0xff]
    %v51 = vld [vmem:[#allocation4 + $0x70] sm:$0xff]
    %v52 = vld [vmem:[#allocation4 + $0x78] sm:$0xff]
    %v53 = vld [vmem:[#allocation4 + $0x80] sm:$0xff]
    %v54 = vld [vmem:[#allocation4 + $0x88] sm:$0xff]
    %v55 = vld [vmem:[#allocation4 + $0x90] sm:$0xff]
    %v56 = vld [vmem:[#allocation4 + $0x98] sm:$0xff]
    %v57 = vld [vmem:[#allocation4 + $0xa0] sm:$0xff]
    %v58 = vld [vmem:[#allocation4 + $0xa8] sm:$0xff]
    %v59 = vld [vmem:[#allocation4 + $0xb0] sm:$0xff]
    %v60 = vld [vmem:[#allocation4 + $0xb8] sm:$0xff]
    %v61 = vld [vmem:[#allocation4 + $0xc0] sm:$0xff]
    %v62 = vld [vmem:[#allocation4 + $0xc8] sm:$0xff]
    %v63 = vld [vmem:[#allocation4 + $0xd0] sm:$0xff]
    %v64 = vld [vmem:[#allocation4 + $0xd8] sm:$0xff]
    %v65 = vld [vmem:[#allocation4 + $0xe0] sm:$0xff]
    %v66 = vld [vmem:[#allocation4 + $0xe8] sm:$0xff]
    %v67 = vld [vmem:[#allocation4 + $0xf0] sm:$0xff]
    %v68 = vld [vmem:[#allocation4 + $0xf8] sm:$0xff]
    %v69 = vadd.f32 %v37, %v38
    %70 = vadd.xlane.f32.xlu0 %v69
    %v71 = vpop.xlane.xlu0 %70
    %v72 = vadd.f32 %v39, %v40
    %73 = vadd.xlane.f32.xlu0 %v72
    %v74 = vpop.xlane.xlu0 %73
    %v75 = vadd.f32 %v41, %v42
    %76 = vadd.xlane.f32.xlu0 %v75
    %v77 = vpop.xlane.xlu0 %76
    %v78 = vadd.f32 %v43, %v44
    %79 = vadd.xlane.f32.xlu0 %v78
    %v80 = vpop.xlane.xlu0 %79
    %v81 = vadd.f32 %v45, %v46
    %82 = vadd.xlane.f32.xlu0 %v81
    %v83 = vpop.xlane.xlu0 %82
    %v84 = vadd.f32 %v47, %v48
    %85 = vadd.xlane.f32.xlu0 %v84
    %v86 = vpop.xlane.xlu0 %85
    %v87 = vadd.f32 %v49, %v50
    %88 = vadd.xlane.f32.xlu0 %v87
    %v89 = vpop.xlane.xlu0 %88
    %v90 = vadd.f32 %v51, %v52
    %91 = vadd.xlane.f32.xlu0 %v90
    %v92 = vpop.xlane.xlu0 %91
    %v93 = vadd.f32 %v53, %v54
    %94 = vadd.xlane.f32.xlu0 %v93
    %v95 = vpop.xlane.xlu0 %94
    %v96 = vadd.f32 %v55, %v56
    %97 = vadd.xlane.f32.xlu0 %v96
    %v98 = vpop.xlane.xlu0 %97
    %v99 = vadd.f32 %v57, %v58
    %100 = vadd.xlane.f32.xlu0 %v99
    %v101 = vpop.xlane.xlu0 %100
    %v102 = vadd.f32 %v59, %v60
    %103 = vadd.xlane.f32.xlu0 %v102
    %v104 = vpop.xlane.xlu0 %103
    %v105 = vadd.f32 %v61, %v62
    %106 = vadd.xlane.f32.xlu0 %v105
    %v107 = vpop.xlane.xlu0 %106
    %v108 = vadd.f32 %v63, %v64
    %109 = vadd.xlane.f32.xlu0 %v108
    %v110 = vpop.xlane.xlu0 %109
    %v111 = vadd.f32 %v65, %v66
    %112 = vadd.xlane.f32.xlu0 %v111
    %v113 = vpop.xlane.xlu0 %112
    %v114 = vadd.f32 %v67, %v68
    %115 = vadd.xlane.f32.xlu0 %v114
    %v116 = vpop.xlane.xlu0 %115
    %v117 = vld [vmem:[%s2] sm:$0xff]
    %v118 = vld [vmem:[%s2 + $0x8] sm:$0xff]
    %v119 = vld [vmem:[%s2 + $0x10] sm:$0xff]
    %v120 = vld [vmem:[%s2 + $0x18] sm:$0xff]
    %v121 = vld [vmem:[%s2 + $0x20] sm:$0xff]
    %v122 = vld [vmem:[%s2 + $0x28] sm:$0xff]
    %v123 = vld [vmem:[%s2 + $0x30] sm:$0xff]
    %v124 = vld [vmem:[%s2 + $0x38] sm:$0xff]
    %v125 = vld [vmem:[%s3] sm:$0x1]
    %v127 = vlaneseq
    %v128 = vshrl.u32 %v127, 7
    %v129 = vsub.s32 0, %v128
    %v130 = vrot.slane %v125, %v129
    %v148 = vlaneseq
    %v149 = vand.u32 %v148, 127
    %v150 = vlaneseq
    %v151 = vshrl.u32 %v150, 7
    %v152 = vsub.s32 %v149, %v151
    %v153 = vrot.slane %v71, %v152
    %v154 = vadd.s32 %v149, 4294967288
    %v155 = vlaneseq
    %v156 = vshrl.u32 %v155, 7
    %v157 = vsub.s32 %v154, %v156
    %v158 = vrot.slane %v74, %v157
    %vm159 = vcmask 130112
    %v160 = vsel %vm159, %v158, %v153
    %v161 = vadd.s32 %v149, 4294967280
    %v162 = vlaneseq
    %v163 = vshrl.u32 %v162, 7
    %v164 = vsub.s32 %v161, %v163
    %v165 = vrot.slane %v77, %v164
    %vm166 = vcmask 195712
    %v167 = vsel %vm166, %v165, %v160
    %v168 = vadd.s32 %v149, 4294967272
    %v169 = vlaneseq
    %v170 = vshrl.u32 %v169, 7
    %v171 = vsub.s32 %v168, %v170
    %v172 = vrot.slane %v80, %v171
    %vm173 = vcmask 261312
    %v174 = vsel %vm173, %v172, %v167
    %v175 = vadd.s32 %v149, 4294967264
    %v176 = vlaneseq
    %v177 = vshrl.u32 %v176, 7
    %v178 = vsub.s32 %v175, %v177
    %v179 = vrot.slane %v83, %v178
    %vm180 = vcmask 326912
    %v181 = vsel %vm180, %v179, %v174
    %v182 = vadd.s32 %v149, 4294967256
    %v183 = vlaneseq
    %v184 = vshrl.u32 %v183, 7
    %v185 = vsub.s32 %v182, %v184
    %v186 = vrot.slane %v86, %v185
    %vm187 = vcmask 392512
    %v188 = vsel %vm187, %v186, %v181
    %v189 = vadd.s32 %v149, 4294967248
    %v190 = vlaneseq
    %v191 = vshrl.u32 %v190, 7
    %v192 = vsub.s32 %v189, %v191
    %v193 = vrot.slane %v89, %v192
    %vm194 = vcmask 458112
    %v195 = vsel %vm194, %v193, %v188
    %v196 = vadd.s32 %v149, 4294967240
    %v197 = vlaneseq
    %v198 = vshrl.u32 %v197, 7
    %v199 = vsub.s32 %v196, %v198
    %v200 = vrot.slane %v92, %v199
    %vm201 = vcmask 523712
    %v202 = vsel %vm201, %v200, %v195
    %v203 = vlaneseq
    %v204 = vshrl.u32 %v203, 7
    %v205 = vsub.s32 %v149, %v204
    %v206 = vrot.slane %v95, %v205
    %v207 = vlaneseq
    %v208 = vshrl.u32 %v207, 7
    %v209 = vsub.s32 %v154, %v208
    %v210 = vrot.slane %v98, %v209
    %v211 = vsel %vm159, %v210, %v206
    %v212 = vlaneseq
    %v213 = vshrl.u32 %v212, 7
    %v214 = vsub.s32 %v161, %v213
    %v215 = vrot.slane %v101, %v214
    %v216 = vsel %vm166, %v215, %v211
    %v217 = vlaneseq
    %v218 = vshrl.u32 %v217, 7
    %v219 = vsub.s32 %v168, %v218
    %v220 = vrot.slane %v104, %v219
    %v221 = vsel %vm173, %v220, %v216
    %v222 = vlaneseq
    %v223 = vshrl.u32 %v222, 7
    %v224 = vsub.s32 %v175, %v223
    %v225 = vrot.slane %v107, %v224
    %v226 = vsel %vm180, %v225, %v221
    %v227 = vlaneseq
    %v228 = vshrl.u32 %v227, 7
    %v229 = vsub.s32 %v182, %v228
    %v230 = vrot.slane %v110, %v229
    %v231 = vsel %vm187, %v230, %v226
    %v232 = vlaneseq
    %v233 = vshrl.u32 %v232, 7
    %v234 = vsub.s32 %v189, %v233
    %v235 = vrot.slane %v113, %v234
    %v236 = vsel %vm194, %v235, %v231
    %v237 = vlaneseq
    %v238 = vshrl.u32 %v237, 7
    %v239 = vsub.s32 %v196, %v238
    %v240 = vrot.slane %v116, %v239
    %v241 = vsel %vm201, %v240, %v236
    %vm242 = vcmask 1041409
    %v243 = vsel %vm242, %v241, %v202
    %vm244 = vcmask 523264
    %v245 = vsel %vm244, %v243, 0
    %247 = vmatprep.subr.mxu0 0.0
    %248 = vmatpush1.msra.mxu0 %v117
    %249 = vmatprep.subr.mxu0 0.0
    %250 = vmatpush1.msra.mxu0 %v118
    %251 = vmatprep.subr.mxu0 0.0
    %252 = vmatpush1.msra.mxu0 %v119
    %253 = vmatprep.subr.mxu0 0.0
    %254 = vmatpush1.msra.mxu0 %v120
    %255 = vmatprep.subr.mxu0 0.0
    %256 = vmatpush1.msra.mxu0 %v121
    %257 = vmatprep.subr.mxu0 0.0
    %258 = vmatpush1.msra.mxu0 %v122
    %259 = vmatprep.subr.mxu0 0.0
    %260 = vmatpush1.msra.mxu0 %v123
    %261 = vmatprep.subr.mxu0 0.0
    %262 = vmatpush1.msra.mxu0 %v124
    %263 = vmatprep.subr.mxu0 0.0
    %264 = vmatpush1.msra.mxu0 0.0
    %265 = vmatprep.subr.mxu0 0.0
    %266 = vmatpush1.msra.mxu0 0.0
    %267 = vmatprep.subr.mxu0 0.0
    %268 = vmatpush1.msra.mxu0 0.0
    %269 = vmatprep.subr.mxu0 0.0
    %270 = vmatpush1.msra.mxu0 0.0
    %271 = vmatprep.subr.mxu0 0.0
    %272 = vmatpush1.msra.mxu0 0.0
    %273 = vmatprep.subr.mxu0 0.0
    %274 = vmatpush1.msra.mxu0 0.0
    %275 = vmatprep.subr.mxu0 0.0
    %276 = vmatpush1.msra.mxu0 0.0
    %277 = vmatprep.subr.mxu0 0.0
    %278 = vmatpush1.msra.mxu0 0.0
    %279 = vmatprep.subr.mxu0 0.0
    %280 = vmatpush1.msra.mxu0 0.0
    %281 = vmatprep.subr.mxu0 0.0
    %282 = vmatpush1.msra.mxu0 0.0
    %283 = vmatprep.subr.mxu0 0.0
    %284 = vmatpush1.msra.mxu0 0.0
    %285 = vmatprep.subr.mxu0 0.0
    %286 = vmatpush1.msra.mxu0 0.0
    %287 = vmatprep.subr.mxu0 0.0
    %288 = vmatpush1.msra.mxu0 0.0
    %289 = vmatprep.subr.mxu0 0.0
    %290 = vmatpush1.msra.mxu0 0.0
    %291 = vmatprep.subr.mxu0 0.0
    %292 = vmatpush1.msra.mxu0 0.0
    %293 = vmatprep.subr.mxu0 0.0
    %294 = vmatpush1.msra.mxu0 0.0
    %295 = vmatprep.subr.mxu0 0.0
    %296 = vmatpush1.msra.mxu0 0.0
    %297 = vmatprep.subr.mxu0 0.0
    %298 = vmatpush1.msra.mxu0 0.0
    %299 = vmatprep.subr.mxu0 0.0
    %300 = vmatpush1.msra.mxu0 0.0
    %301 = vmatprep.subr.mxu0 0.0
    %302 = vmatpush1.msra.mxu0 0.0
    %303 = vmatprep.subr.mxu0 0.0
    %304 = vmatpush1.msra.mxu0 0.0
    %305 = vmatprep.subr.mxu0 0.0
    %306 = vmatpush1.msra.mxu0 0.0
    %307 = vmatprep.subr.mxu0 0.0
    %308 = vmatpush1.msra.mxu0 0.0
    %309 = vmatprep.subr.mxu0 0.0
    %310 = vmatpush1.msra.mxu0 0.0
    %311 = vmatprep.mubr.f32.mxu0 0.0
    %312 = vmatmul.mubr.f32.gmra.mrb[0].mxu0 %v245
    %v313 = vpop.f32.mrb[0].mxu0
    %v314 = vadd.f32 %v130, %v313
    %v315 = vpop.f32.mrb[0].mxu0
    %316 = vdwg.mxu0
    %s317 = sld [smem:[#allocation3]]
    %vm318 = vcmp.ge.f32.partialorder %v314, 0.0
    %v319 = vstv %s317
    %v320 = vmul.f32 %v319, %v314
    %v321 = vsel %vm318, %v314, %v320
    %v322 = vld [vmem:[%s4] sm:$0xf]
    %v323 = vld [vmem:[%s5] sm:$0x1]
    %v325 = vlaneseq
    %v326 = vshrl.u32 %v325, 7
    %v327 = vsub.s32 0, %v326
    %v328 = vrot.slane %v323, %v327
    %vm330 = vcmask 31744
    %v332 = vsel %vm330, %v321, 0
    %vm334 = vcmask 1043456
    %v336 = vsel %vm334, %v322, 0
    %338 = vmatprep.subr.mxu0 0.0
    %339 = vmatpush1.msra.mxu0 %v336
    %340 = vmatprep.subr.mxu0 0.0
    %341 = vmatpush1.msra.mxu0 0.0
    %342 = vmatprep.subr.mxu0 0.0
    %343 = vmatpush1.msra.mxu0 0.0
    %344 = vmatprep.subr.mxu0 0.0
    %345 = vmatpush1.msra.mxu0 0.0
    %346 = vmatprep.subr.mxu0 0.0
    %347 = vmatpush1.msra.mxu0 0.0
    %348 = vmatprep.subr.mxu0 0.0
    %349 = vmatpush1.msra.mxu0 0.0
    %350 = vmatprep.subr.mxu0 0.0
    %351 = vmatpush1.msra.mxu0 0.0
    %352 = vmatprep.subr.mxu0 0.0
    %353 = vmatpush1.msra.mxu0 0.0
    %354 = vmatprep.subr.mxu0 0.0
    %355 = vmatpush1.msra.mxu0 0.0
    %356 = vmatprep.subr.mxu0 0.0
    %357 = vmatpush1.msra.mxu0 0.0
    %358 = vmatprep.subr.mxu0 0.0
    %359 = vmatpush1.msra.mxu0 0.0
    %360 = vmatprep.subr.mxu0 0.0
    %361 = vmatpush1.msra.mxu0 0.0
    %362 = vmatprep.subr.mxu0 0.0
    %363 = vmatpush1.msra.mxu0 0.0
    %364 = vmatprep.subr.mxu0 0.0
    %365 = vmatpush1.msra.mxu0 0.0
    %366 = vmatprep.subr.mxu0 0.0
    %367 = vmatpush1.msra.mxu0 0.0
    %368 = vmatprep.subr.mxu0 0.0
    %369 = vmatpush1.msra.mxu0 0.0
    %370 = vmatprep.subr.mxu0 0.0
    %371 = vmatpush1.msra.mxu0 0.0
    %372 = vmatprep.subr.mxu0 0.0
    %373 = vmatpush1.msra.mxu0 0.0
    %374 = vmatprep.subr.mxu0 0.0
    %375 = vmatpush1.msra.mxu0 0.0
    %376 = vmatprep.subr.mxu0 0.0
    %377 = vmatpush1.msra.mxu0 0.0
    %378 = vmatprep.subr.mxu0 0.0
    %379 = vmatpush1.msra.mxu0 0.0
    %380 = vmatprep.subr.mxu0 0.0
    %381 = vmatpush1.msra.mxu0 0.0
    %382 = vmatprep.subr.mxu0 0.0
    %383 = vmatpush1.msra.mxu0 0.0
    %384 = vmatprep.subr.mxu0 0.0
    %385 = vmatpush1.msra.mxu0 0.0
    %386 = vmatprep.subr.mxu0 0.0
    %387 = vmatpush1.msra.mxu0 0.0
    %388 = vmatprep.subr.mxu0 0.0
    %389 = vmatpush1.msra.mxu0 0.0
    %390 = vmatprep.subr.mxu0 0.0
    %391 = vmatpush1.msra.mxu0 0.0
    %392 = vmatprep.subr.mxu0 0.0
    %393 = vmatpush1.msra.mxu0 0.0
    %394 = vmatprep.subr.mxu0 0.0
    %395 = vmatpush1.msra.mxu0 0.0
    %396 = vmatprep.subr.mxu0 0.0
    %397 = vmatpush1.msra.mxu0 0.0
    %398 = vmatprep.subr.mxu0 0.0
    %399 = vmatpush1.msra.mxu0 0.0
    %400 = vmatprep.subr.mxu0 0.0
    %401 = vmatpush1.msra.mxu0 0.0
    %402 = vmatprep.mubr.f32.mxu0 0.0
    %403 = vmatmul.mubr.f32.gmra.mrb[0].mxu0 %v332
    %v404 = vpop.f32.mrb[0].mxu0
    %v405 = vadd.f32 %v328, %v404
    %v406 = vpop.f32.mrb[0].mxu0
    %407 = vdwg.mxu0
    %v408 = vxor.u32 %v405, 2147483648
    %v409 = vmul.f32 %v408, 1.442695
    %v410 = vpow.pop %v409
    %v411 = vadd.f32 %v410, 1.0
    %v412 = vrcp.pop %v411
    %v413 = vmul.f32 1.0, %v412
    %v414 = vlaneseq
    %v415 = vshrl.u32 %v414, 7
    %v416 = vsub.s32 0, %v415
    %v417 = vrot.slane %v413, %v416
    %419 = vbcast.lane.b32.xlu0 %v417, 256
    %v420 = vpop.permute.xlu0 %419
    %s422 = sor.u32 256, 8
    %423 = vbcast.lane.b32.xlu0 %v417, %s422
    %v424 = vpop.permute.xlu0 %423
    %s426 = sor.u32 256, 16
    %427 = vbcast.lane.b32.xlu0 %v417, %s426
    %v428 = vpop.permute.xlu0 %427
    %s430 = sor.u32 256, 24
    %431 = vbcast.lane.b32.xlu0 %v417, %s430
    %v432 = vpop.permute.xlu0 %431
    %s434 = sor.u32 256, 32
    %435 = vbcast.lane.b32.xlu0 %v417, %s434
    %v436 = vpop.permute.xlu0 %435
    %s438 = sor.u32 256, 40
    %439 = vbcast.lane.b32.xlu0 %v417, %s438
    %v440 = vpop.permute.xlu0 %439
    %s442 = sor.u32 256, 48
    %443 = vbcast.lane.b32.xlu0 %v417, %s442
    %v444 = vpop.permute.xlu0 %443
    %s446 = sor.u32 256, 56
    %447 = vbcast.lane.b32.xlu0 %v417, %s446
    %v448 = vpop.permute.xlu0 %447
    %v449 = vlaneseq
    %v450 = vshrl.u32 %v449, 7
    %v451 = vsub.s32 1, %v450
    %v452 = vrot.slane %v413, %v451
    %454 = vbcast.lane.b32.xlu0 %v452, 256
    %v455 = vpop.permute.xlu0 %454
    %s457 = sor.u32 256, 8
    %458 = vbcast.lane.b32.xlu0 %v452, %s457
    %v459 = vpop.permute.xlu0 %458
    %s461 = sor.u32 256, 16
    %462 = vbcast.lane.b32.xlu0 %v452, %s461
    %v463 = vpop.permute.xlu0 %462
    %s465 = sor.u32 256, 24
    %466 = vbcast.lane.b32.xlu0 %v452, %s465
    %v467 = vpop.permute.xlu0 %466
    %s469 = sor.u32 256, 32
    %470 = vbcast.lane.b32.xlu0 %v452, %s469
    %v471 = vpop.permute.xlu0 %470
    %s473 = sor.u32 256, 40
    %474 = vbcast.lane.b32.xlu0 %v452, %s473
    %v475 = vpop.permute.xlu0 %474
    %s477 = sor.u32 256, 48
    %478 = vbcast.lane.b32.xlu0 %v452, %s477
    %v479 = vpop.permute.xlu0 %478
    %s481 = sor.u32 256, 56
    %482 = vbcast.lane.b32.xlu0 %v452, %s481
    %v483 = vpop.permute.xlu0 %482
    %v484 = vmul.f32 %v37, %v420
    %v485 = vmul.f32 %v38, %v420
    %v486 = vmul.f32 %v39, %v424
    %v487 = vmul.f32 %v40, %v424
    %v488 = vmul.f32 %v41, %v428
    %v489 = vmul.f32 %v42, %v428
    %v490 = vmul.f32 %v43, %v432
    %v491 = vmul.f32 %v44, %v432
    %v492 = vmul.f32 %v45, %v436
    %v493 = vmul.f32 %v46, %v436
    %v494 = vmul.f32 %v47, %v440
    %v495 = vmul.f32 %v48, %v440
    %v496 = vmul.f32 %v49, %v444
    %v497 = vmul.f32 %v50, %v444
    %v498 = vmul.f32 %v51, %v448
    %v499 = vmul.f32 %v52, %v448
    %v500 = vmul.f32 %v53, %v455
    %v501 = vmul.f32 %v54, %v455
    %v502 = vmul.f32 %v55, %v459
    %v503 = vmul.f32 %v56, %v459
    %v504 = vmul.f32 %v57, %v463
    %v505 = vmul.f32 %v58, %v463
    %v506 = vmul.f32 %v59, %v467
    %v507 = vmul.f32 %v60, %v467
    %v508 = vmul.f32 %v61, %v471
    %v509 = vmul.f32 %v62, %v471
    %v510 = vmul.f32 %v63, %v475
    %v511 = vmul.f32 %v64, %v475
    %v512 = vmul.f32 %v65, %v479
    %v513 = vmul.f32 %v66, %v479
    %v514 = vmul.f32 %v67, %v483
    %v515 = vmul.f32 %v68, %v483
    %516 = vst [vmem:[#allocation7] sm:$0xff] %v484
    %517 = vst [vmem:[#allocation7 + $0x8] sm:$0xff] %v485
    %518 = vst [vmem:[#allocation7 + $0x10] sm:$0xff] %v486
    %519 = vst [vmem:[#allocation7 + $0x18] sm:$0xff] %v487
    %520 = vst [vmem:[#allocation7 + $0x20] sm:$0xff] %v488
    %521 = vst [vmem:[#allocation7 + $0x28] sm:$0xff] %v489
    %522 = vst [vmem:[#allocation7 + $0x30] sm:$0xff] %v490
    %523 = vst [vmem:[#allocation7 + $0x38] sm:$0xff] %v491
    %524 = vst [vmem:[#allocation7 + $0x40] sm:$0xff] %v492
    %525 = vst [vmem:[#allocation7 + $0x48] sm:$0xff] %v493
    %526 = vst [vmem:[#allocation7 + $0x50] sm:$0xff] %v494
    %527 = vst [vmem:[#allocation7 + $0x58] sm:$0xff] %v495
    %528 = vst [vmem:[#allocation7 + $0x60] sm:$0xff] %v496
    %529 = vst [vmem:[#allocation7 + $0x68] sm:$0xff] %v497
    %530 = vst [vmem:[#allocation7 + $0x70] sm:$0xff] %v498
    %531 = vst [vmem:[#allocation7 + $0x78] sm:$0xff] %v499
    %532 = vst [vmem:[#allocation7 + $0x80] sm:$0xff] %v500
    %533 = vst [vmem:[#allocation7 + $0x88] sm:$0xff] %v501
    %534 = vst [vmem:[#allocation7 + $0x90] sm:$0xff] %v502
    %535 = vst [vmem:[#allocation7 + $0x98] sm:$0xff] %v503
    %536 = vst [vmem:[#allocation7 + $0xa0] sm:$0xff] %v504
    %537 = vst [vmem:[#allocation7 + $0xa8] sm:$0xff] %v505
    %538 = vst [vmem:[#allocation7 + $0xb0] sm:$0xff] %v506
    %539 = vst [vmem:[#allocation7 + $0xb8] sm:$0xff] %v507
    %540 = vst [vmem:[#allocation7 + $0xc0] sm:$0xff] %v508
    %541 = vst [vmem:[#allocation7 + $0xc8] sm:$0xff] %v509
    %542 = vst [vmem:[#allocation7 + $0xd0] sm:$0xff] %v510
    %543 = vst [vmem:[#allocation7 + $0xd8] sm:$0xff] %v511
    %544 = vst [vmem:[#allocation7 + $0xe0] sm:$0xff] %v512
    %545 = vst [vmem:[#allocation7 + $0xe8] sm:$0xff] %v513
    %546 = vst [vmem:[#allocation7 + $0xf0] sm:$0xff] %v514
    %547 = vst [vmem:[#allocation7 + $0xf8] sm:$0xff] %v515
    // Predicated region
    $region26: #{tpu_custom_call.1} parent=1 // pred_check
      _
    $region27: #{tpu_custom_call.1} parent=1 // pred_check_branch
      %549 = sbr.rel (0) target = $region29
    $region28: #{tpu_custom_call.1} parent=1 // pred_region
      %s551 = ssub.s32 4096, 4096
      %552 = vsyncadd [#allocation6], %s551
      %s553 = sshll.u32 [#allocation7], 4
      %s554 = int_to_ptr.vmem [resolvable:$true] %s553
      %559 = dma.vmem_to_hbm [thread:$0]  %s554, 4096, %s6, [#allocation6], 256, 256, 16
    $region29: #{tpu_custom_call.1} parent=1 // pred_fallthru
      _
    // Predicated region
    $region30: #{tpu_custom_call.1} parent=1 // pred_check
      _
    $region31: #{tpu_custom_call.1} parent=1 // pred_check_branch
      %561 = sbr.rel (0) target = $region33
    $region32: #{tpu_custom_call.1} parent=1 // pred_region
      %562 = dma.done [#allocation6], 4096
    $region33: #{tpu_custom_call.1} parent=1 // pred_fallthru
      _
    %563 = vsyncpa [#allocation5], 1
    %564 = vsyncpa [#allocation6], 1

</llo_original>
